<compile_context>
chip_gen: v7x
topology: tpu7x:2x2x1
jax: 0.10.0
libtpu: 0.0.40
codegen_flags: <defaults>
</compile_context>

<pallas_src>
import functools

import jax
import jax.numpy as jnp
from jax import lax
from jax.experimental import pallas as pl
from jax.experimental.pallas import tpu as pltpu

KH = KW = 4
PAD = 1
NEG_SLOPE = 0.2
EPS = 1e-5


def _make_fused_kernel(Cin, Cout, OH, OW, stride):
    K = Cin * KH * KW
    M = OH * OW

    def kernel(xprep_ref, w_ref, b_ref, o_ref, p_ref):
        # xprep_ref: (KW*stride, Cin, Hr*OW)  stride-phase input, one batch elem
        #            xprep[kw*stride+pr, c, i*OW+ow] = xpad[c, stride*i+pr, stride*ow+kw]
        # w_ref:     (Cout, K)   weight with k = (kh*KW + kw)*Cin + cin
        # b_ref:     (Cout, 1)
        # o_ref:     (Cout, M)   fused conv+norm+lrelu output for this batch elem
        # p_ref:     (K, M)      VMEM scratch: im2col patch matrix
        # ---- in-kernel im2col: 16 contiguous slices -> (K, M) scratch ----
        for kh in range(KH):
            pr, qr = kh % stride, kh // stride
            for kw in range(KW):
                j = kw * stride + pr
                row0 = (kh * KW + kw) * Cin
                xrow = xprep_ref[j]                       # (Cin, Hr*OW)
                p_ref[row0:row0 + Cin, :] = xrow[:, qr * OW:qr * OW + M]
        # ---- conv as a single MXU GEMM + bias: (Cout, K) @ (K, M) ----
        y = jnp.dot(w_ref[...], p_ref[...], preferred_element_type=jnp.float32)
        y = y + b_ref[...]
        # ---- InstanceNorm2d (affine=False, biased var, eps) + LeakyReLU(0.2) ----
        mean = jnp.mean(y, axis=-1, keepdims=True)
        d = y - mean
        var = jnp.mean(d * d, axis=-1, keepdims=True)
        yn = d * lax.rsqrt(var + EPS)
        o_ref[...] = jnp.where(yn >= 0, yn, NEG_SLOPE * yn)

    return kernel


@functools.partial(jax.jit, static_argnames=("stride",))
def conv_instancenorm_leakyrelu(x, weight, bias, *, stride):
    """x: (N, Cin, H, W) f32; weight: (Cout, Cin, 4, 4); bias: (Cout,)."""
    N, Cin, H, W = x.shape
    Cout = weight.shape[0]

    # Reflect pad (padding_mode='reflect', padding=1) -- cheap XLA glue.
    xp = jnp.pad(x, ((0, 0), (0, 0), (PAD, PAD), (PAD, PAD)), mode="reflect")
    Hp, Wp = H + 2 * PAD, W + 2 * PAD
    OH = (Hp - KH) // stride + 1
    OW = (Wp - KW) // stride + 1
    K = Cin * KH * KW
    M = OH * OW

    # Stride-phase repack (cheap, ~1-2x copy of x, NOT the KxM patch matrix):
    #   xprep[n, kw*stride + pr, c, i*OW + ow] = xp[n, c, stride*i + pr, stride*ow + kw]
    # so every (kh, kw) patch block inside the kernel is a static, contiguous,
    # unit-stride slice along the lane dimension.
    Hr = OH + (KH - 1) // stride
    Hpad = max(Hp, stride * Hr)
    if Hpad > Hp:  # zero rows are never selected by the kernel; shape padding only
        xp = jnp.pad(xp, ((0, 0), (0, 0), (0, Hpad - Hp), (0, 0)))
    xw = jnp.stack(
        [xp[:, :, :, kw::stride][:, :, :, :OW] for kw in range(KW)], axis=1
    )  # (N, KW, Cin, Hpad, OW)
    xph = jnp.stack(
        [xw[:, :, :, pr::stride, :][:, :, :, :Hr, :] for pr in range(stride)],
        axis=2,
    )  # (N, KW, stride, Cin, Hr, OW)
    xprep = xph.reshape(N, KW * stride, Cin, Hr * OW)

    # Weight laid out as (Cout, K) with k = (kh*KW + kw)*Cin + cin, matching the
    # row order of the in-kernel patch matrix; bias as (Cout, 1).
    w2 = jnp.transpose(weight, (0, 2, 3, 1)).reshape(Cout, K)
    b2 = bias.reshape(Cout, 1)

    kernel = _make_fused_kernel(Cin, Cout, OH, OW, stride)

    out = pl.pallas_call(
        kernel,
        out_shape=jax.ShapeDtypeStruct((N, Cout, M), jnp.float32),
        grid=(N,),
        in_specs=[
            pl.BlockSpec((None, KW * stride, Cin, Hr * OW),
                         lambda n: (n, 0, 0, 0)),
            pl.BlockSpec((Cout, K), lambda n: (0, 0)),
            pl.BlockSpec((Cout, 1), lambda n: (0, 0)),
        ],
        out_specs=pl.BlockSpec((None, Cout, M), lambda n: (n, 0, 0)),
        scratch_shapes=[pltpu.VMEM((K, M), jnp.float32)],
        compiler_params=pltpu.CompilerParams(
            dimension_semantics=("parallel",)),
    )(xprep, w2, b2)

    return out.reshape(N, Cout, OH, OW)


if __name__ == "__main__":
    # Small shapes consistent with the module: N=2, Cin=4, Cout=8, H=W=16, stride=2.
    N, Cin, Cout, H, W, stride = 2, 4, 8, 16, 16, 2

    key = jax.random.PRNGKey(0)
    kx, kw_, kb = jax.random.split(key, 3)
    x = jax.random.normal(kx, (N, Cin, H, W), dtype=jnp.float32)
    weight = 0.1 * jax.random.normal(kw_, (Cout, Cin, KH, KW), dtype=jnp.float32)
    bias = 0.1 * jax.random.normal(kb, (Cout,), dtype=jnp.float32)

    out = conv_instancenorm_leakyrelu(x, weight, bias, stride=stride)
    out = jax.block_until_ready(out)

    # Pure-JAX reference for sanity.
    xp = jnp.pad(x, ((0, 0), (0, 0), (PAD, PAD), (PAD, PAD)), mode="reflect")
    conv_ref = lax.conv_general_dilated(
        xp, weight, window_strides=(stride, stride), padding="VALID",
        dimension_numbers=("NCHW", "OIHW", "NCHW")) + bias[None, :, None, None]
    mean = conv_ref.mean(axis=(2, 3), keepdims=True)
    var = ((conv_ref - mean) ** 2).mean(axis=(2, 3), keepdims=True)
    nrm = (conv_ref - mean) / jnp.sqrt(var + EPS)
    ref = jnp.where(nrm >= 0, nrm, NEG_SLOPE * nrm)

    OH = (H + 2 * PAD - KH) // stride + 1
    OW = (W + 2 * PAD - KW) // stride + 1
    assert out.shape == ref.shape == (N, Cout, OH, OW)
    assert jnp.allclose(out, ref, atol=1e-3, rtol=1e-3)
    print("KERNEL_OK")
</pallas_src>

<mosaic_0001>
module attributes {stable_mosaic.version = 11 : i64} {
  func.func @kernel(%arg0: i32, %arg1: memref<1x8x4x72xf32, #tpu.memory_space<vmem>>, %arg2: memref<8x64xf32, #tpu.memory_space<vmem>>, %arg3: memref<8x1xf32, #tpu.memory_space<vmem>>, %arg4: memref<1x8x64xf32, #tpu.memory_space<vmem>>, %arg5: memref<64x64xf32, #tpu.memory_space<vmem>>) attributes {dimension_semantics = [#tpu.dimension_semantics<parallel>], iteration_bounds = array<i64: 2>, scalar_prefetch = 0 : i64, scratch_operands = 1 : i64, tpu.core_type = #tpu.core_type<tc>, window_params = [{transform_indices = @transform_0, window_bounds = array<i64: 1, 8, 4, 72>}, {pipeline_mode = #tpu.pipeline_mode<synchronous>, transform_indices = @transform_1, window_bounds = array<i64: 8, 64>}, {pipeline_mode = #tpu.pipeline_mode<synchronous>, transform_indices = @transform_2, window_bounds = array<i64: 8, 1>}, {transform_indices = @transform_3, window_bounds = array<i64: 1, 8, 64>}]} {
    %c0 = arith.constant 0 : index
    %c0_0 = arith.constant 0 : index
    %c0_1 = arith.constant 0 : index
    %c0_2 = arith.constant 0 : index
    %0 = vector.load %arg1[%c0, %c0_0, %c0_1, %c0_2] : memref<1x8x4x72xf32, #tpu.memory_space<vmem>>, vector<1x1x4x72xf32>
    %1 = vector.shape_cast %0 : vector<1x1x4x72xf32> to vector<4x72xf32>
    %2 = vector.extract_strided_slice %1 {offsets = [0, 0], sizes = [4, 64], strides = [1, 1]} : vector<4x72xf32> to vector<4x64xf32>
    %c0_3 = arith.constant 0 : index
    %c0_4 = arith.constant 0 : index
    %3 = vector.load %arg5[%c0_3, %c0_4] : memref<64x64xf32, #tpu.memory_space<vmem>>, vector<4x64xf32>
    tpu.vector_store %arg5[%c0_3, %c0_4], %2 {strides = array<i32>} : memref<64x64xf32, #tpu.memory_space<vmem>>, vector<4x64xf32>,
    %c0_5 = arith.constant 0 : index
    %c2 = arith.constant 2 : index
    %c0_6 = arith.constant 0 : index
    %c0_7 = arith.constant 0 : index
    %4 = vector.load %arg1[%c0_5, %c2, %c0_6, %c0_7] : memref<1x8x4x72xf32, #tpu.memory_space<vmem>>, vector<1x1x4x72xf32>
    %5 = vector.shape_cast %4 : vector<1x1x4x72xf32> to vector<4x72xf32>
    %6 = vector.extract_strided_slice %5 {offsets = [0, 0], sizes = [4, 64], strides = [1, 1]} : vector<4x72xf32> to vector<4x64xf32>
    %c4 = arith.constant 4 : index
    %c0_8 = arith.constant 0 : index
    %7 = vector.load %arg5[%c4, %c0_8] : memref<64x64xf32, #tpu.memory_space<vmem>>, vector<4x64xf32>
    tpu.vector_store %arg5[%c4, %c0_8], %6 {strides = array<i32>} : memref<64x64xf32, #tpu.memory_space<vmem>>, vector<4x64xf32>,
    %c0_9 = arith.constant 0 : index
    %c4_10 = arith.constant 4 : index
    %c0_11 = arith.constant 0 : index
    %c0_12 = arith.constant 0 : index
    %8 = vector.load %arg1[%c0_9, %c4_10, %c0_11, %c0_12] : memref<1x8x4x72xf32, #tpu.memory_space<vmem>>, vector<1x1x4x72xf32>
    %9 = vector.shape_cast %8 : vector<1x1x4x72xf32> to vector<4x72xf32>
    %10 = vector.extract_strided_slice %9 {offsets = [0, 0], sizes = [4, 64], strides = [1, 1]} : vector<4x72xf32> to vector<4x64xf32>
    %c8 = arith.constant 8 : index
    %c0_13 = arith.constant 0 : index
    %11 = vector.load %arg5[%c8, %c0_13] : memref<64x64xf32, #tpu.memory_space<vmem>>, vector<4x64xf32>
    tpu.vector_store %arg5[%c8, %c0_13], %10 {strides = array<i32>} : memref<64x64xf32, #tpu.memory_space<vmem>>, vector<4x64xf32>,
    %c0_14 = arith.constant 0 : index
    %c6 = arith.constant 6 : index
    %c0_15 = arith.constant 0 : index
    %c0_16 = arith.constant 0 : index
    %12 = vector.load %arg1[%c0_14, %c6, %c0_15, %c0_16] : memref<1x8x4x72xf32, #tpu.memory_space<vmem>>, vector<1x1x4x72xf32>
    %13 = vector.shape_cast %12 : vector<1x1x4x72xf32> to vector<4x72xf32>
    %14 = vector.extract_strided_slice %13 {offsets = [0, 0], sizes = [4, 64], strides = [1, 1]} : vector<4x72xf32> to vector<4x64xf32>
    %c12 = arith.constant 12 : index
    %c0_17 = arith.constant 0 : index
    %15 = vector.load %arg5[%c12, %c0_17] : memref<64x64xf32, #tpu.memory_space<vmem>>, vector<4x64xf32>
    tpu.vector_store %arg5[%c12, %c0_17], %14 {strides = array<i32>} : memref<64x64xf32, #tpu.memory_space<vmem>>, vector<4x64xf32>,
    %c0_18 = arith.constant 0 : index
    %c1 = arith.constant 1 : index
    %c0_19 = arith.constant 0 : index
    %c0_20 = arith.constant 0 : index
    %16 = vector.load %arg1[%c0_18, %c1, %c0_19, %c0_20] : memref<1x8x4x72xf32, #tpu.memory_space<vmem>>, vector<1x1x4x72xf32>
    %17 = vector.shape_cast %16 : vector<1x1x4x72xf32> to vector<4x72xf32>
    %18 = vector.extract_strided_slice %17 {offsets = [0, 0], sizes = [4, 64], strides = [1, 1]} : vector<4x72xf32> to vector<4x64xf32>
    %c16 = arith.constant 16 : index
    %c0_21 = arith.constant 0 : index
    %19 = vector.load %arg5[%c16, %c0_21] : memref<64x64xf32, #tpu.memory_space<vmem>>, vector<4x64xf32>
    tpu.vector_store %arg5[%c16, %c0_21], %18 {strides = array<i32>} : memref<64x64xf32, #tpu.memory_space<vmem>>, vector<4x64xf32>,
    %c0_22 = arith.constant 0 : index
    %c3 = arith.constant 3 : index
    %c0_23 = arith.constant 0 : index
    %c0_24 = arith.constant 0 : index
    %20 = vector.load %arg1[%c0_22, %c3, %c0_23, %c0_24] : memref<1x8x4x72xf32, #tpu.memory_space<vmem>>, vector<1x1x4x72xf32>
    %21 = vector.shape_cast %20 : vector<1x1x4x72xf32> to vector<4x72xf32>
    %22 = vector.extract_strided_slice %21 {offsets = [0, 0], sizes = [4, 64], strides = [1, 1]} : vector<4x72xf32> to vector<4x64xf32>
    %c20 = arith.constant 20 : index
    %c0_25 = arith.constant 0 : index
    %23 = vector.load %arg5[%c20, %c0_25] : memref<64x64xf32, #tpu.memory_space<vmem>>, vector<4x64xf32>
    tpu.vector_store %arg5[%c20, %c0_25], %22 {strides = array<i32>} : memref<64x64xf32, #tpu.memory_space<vmem>>, vector<4x64xf32>,
    %c0_26 = arith.constant 0 : index
    %c5 = arith.constant 5 : index
    %c0_27 = arith.constant 0 : index
    %c0_28 = arith.constant 0 : index
    %24 = vector.load %arg1[%c0_26, %c5, %c0_27, %c0_28] : memref<1x8x4x72xf32, #tpu.memory_space<vmem>>, vector<1x1x4x72xf32>
    %25 = vector.shape_cast %24 : vector<1x1x4x72xf32> to vector<4x72xf32>
    %26 = vector.extract_strided_slice %25 {offsets = [0, 0], sizes = [4, 64], strides = [1, 1]} : vector<4x72xf32> to vector<4x64xf32>
    %c24 = arith.constant 24 : index
    %c0_29 = arith.constant 0 : index
    %27 = vector.load %arg5[%c24, %c0_29] : memref<64x64xf32, #tpu.memory_space<vmem>>, vector<4x64xf32>
    tpu.vector_store %arg5[%c24, %c0_29], %26 {strides = array<i32>} : memref<64x64xf32, #tpu.memory_space<vmem>>, vector<4x64xf32>,
    %c0_30 = arith.constant 0 : index
    %c7 = arith.constant 7 : index
    %c0_31 = arith.constant 0 : index
    %c0_32 = arith.constant 0 : index
    %28 = vector.load %arg1[%c0_30, %c7, %c0_31, %c0_32] : memref<1x8x4x72xf32, #tpu.memory_space<vmem>>, vector<1x1x4x72xf32>
    %29 = vector.shape_cast %28 : vector<1x1x4x72xf32> to vector<4x72xf32>
    %30 = vector.extract_strided_slice %29 {offsets = [0, 0], sizes = [4, 64], strides = [1, 1]} : vector<4x72xf32> to vector<4x64xf32>
    %c28 = arith.constant 28 : index
    %c0_33 = arith.constant 0 : index
    %31 = vector.load %arg5[%c28, %c0_33] : memref<64x64xf32, #tpu.memory_space<vmem>>, vector<4x64xf32>
    tpu.vector_store %arg5[%c28, %c0_33], %30 {strides = array<i32>} : memref<64x64xf32, #tpu.memory_space<vmem>>, vector<4x64xf32>,
    %c0_34 = arith.constant 0 : index
    %c0_35 = arith.constant 0 : index
    %c0_36 = arith.constant 0 : index
    %c0_37 = arith.constant 0 : index
    %32 = vector.load %arg1[%c0_34, %c0_35, %c0_36, %c0_37] : memref<1x8x4x72xf32, #tpu.memory_space<vmem>>, vector<1x1x4x72xf32>
    %33 = vector.shape_cast %32 : vector<1x1x4x72xf32> to vector<4x72xf32>
    %34 = vector.extract_strided_slice %33 {offsets = [0, 8], sizes = [4, 64], strides = [1, 1]} : vector<4x72xf32> to vector<4x64xf32>
    %c32 = arith.constant 32 : index
    %c0_38 = arith.constant 0 : index
    %35 = vector.load %arg5[%c32, %c0_38] : memref<64x64xf32, #tpu.memory_space<vmem>>, vector<4x64xf32>
    tpu.vector_store %arg5[%c32, %c0_38], %34 {strides = array<i32>} : memref<64x64xf32, #tpu.memory_space<vmem>>, vector<4x64xf32>,
    %c0_39 = arith.constant 0 : index
    %c2_40 = arith.constant 2 : index
    %c0_41 = arith.constant 0 : index
    %c0_42 = arith.constant 0 : index
    %36 = vector.load %arg1[%c0_39, %c2_40, %c0_41, %c0_42] : memref<1x8x4x72xf32, #tpu.memory_space<vmem>>, vector<1x1x4x72xf32>
    %37 = vector.shape_cast %36 : vector<1x1x4x72xf32> to vector<4x72xf32>
    %38 = vector.extract_strided_slice %37 {offsets = [0, 8], sizes = [4, 64], strides = [1, 1]} : vector<4x72xf32> to vector<4x64xf32>
    %c36 = arith.constant 36 : index
    %c0_43 = arith.constant 0 : index
    %39 = vector.load %arg5[%c36, %c0_43] : memref<64x64xf32, #tpu.memory_space<vmem>>, vector<4x64xf32>
    tpu.vector_store %arg5[%c36, %c0_43], %38 {strides = array<i32>} : memref<64x64xf32, #tpu.memory_space<vmem>>, vector<4x64xf32>,
    %c0_44 = arith.constant 0 : index
    %c4_45 = arith.constant 4 : index
    %c0_46 = arith.constant 0 : index
    %c0_47 = arith.constant 0 : index
    %40 = vector.load %arg1[%c0_44, %c4_45, %c0_46, %c0_47] : memref<1x8x4x72xf32, #tpu.memory_space<vmem>>, vector<1x1x4x72xf32>
    %41 = vector.shape_cast %40 : vector<1x1x4x72xf32> to vector<4x72xf32>
    %42 = vector.extract_strided_slice %41 {offsets = [0, 8], sizes = [4, 64], strides = [1, 1]} : vector<4x72xf32> to vector<4x64xf32>
    %c40 = arith.constant 40 : index
    %c0_48 = arith.constant 0 : index
    %43 = vector.load %arg5[%c40, %c0_48] : memref<64x64xf32, #tpu.memory_space<vmem>>, vector<4x64xf32>
    tpu.vector_store %arg5[%c40, %c0_48], %42 {strides = array<i32>} : memref<64x64xf32, #tpu.memory_space<vmem>>, vector<4x64xf32>,
    %c0_49 = arith.constant 0 : index
    %c6_50 = arith.constant 6 : index
    %c0_51 = arith.constant 0 : index
    %c0_52 = arith.constant 0 : index
    %44 = vector.load %arg1[%c0_49, %c6_50, %c0_51, %c0_52] : memref<1x8x4x72xf32, #tpu.memory_space<vmem>>, vector<1x1x4x72xf32>
    %45 = vector.shape_cast %44 : vector<1x1x4x72xf32> to vector<4x72xf32>
    %46 = vector.extract_strided_slice %45 {offsets = [0, 8], sizes = [4, 64], strides = [1, 1]} : vector<4x72xf32> to vector<4x64xf32>
    %c44 = arith.constant 44 : index
    %c0_53 = arith.constant 0 : index
    %47 = vector.load %arg5[%c44, %c0_53] : memref<64x64xf32, #tpu.memory_space<vmem>>, vector<4x64xf32>
    tpu.vector_store %arg5[%c44, %c0_53], %46 {strides = array<i32>} : memref<64x64xf32, #tpu.memory_space<vmem>>, vector<4x64xf32>,
    %c0_54 = arith.constant 0 : index
    %c1_55 = arith.constant 1 : index
    %c0_56 = arith.constant 0 : index
    %c0_57 = arith.constant 0 : index
    %48 = vector.load %arg1[%c0_54, %c1_55, %c0_56, %c0_57] : memref<1x8x4x72xf32, #tpu.memory_space<vmem>>, vector<1x1x4x72xf32>
    %49 = vector.shape_cast %48 : vector<1x1x4x72xf32> to vector<4x72xf32>
    %50 = vector.extract_strided_slice %49 {offsets = [0, 8], sizes = [4, 64], strides = [1, 1]} : vector<4x72xf32> to vector<4x64xf32>
    %c48 = arith.constant 48 : index
    %c0_58 = arith.constant 0 : index
    %51 = vector.load %arg5[%c48, %c0_58] : memref<64x64xf32, #tpu.memory_space<vmem>>, vector<4x64xf32>
    tpu.vector_store %arg5[%c48, %c0_58], %50 {strides = array<i32>} : memref<64x64xf32, #tpu.memory_space<vmem>>, vector<4x64xf32>,
    %c0_59 = arith.constant 0 : index
    %c3_60 = arith.constant 3 : index
    %c0_61 = arith.constant 0 : index
    %c0_62 = arith.constant 0 : index
    %52 = vector.load %arg1[%c0_59, %c3_60, %c0_61, %c0_62] : memref<1x8x4x72xf32, #tpu.memory_space<vmem>>, vector<1x1x4x72xf32>
    %53 = vector.shape_cast %52 : vector<1x1x4x72xf32> to vector<4x72xf32>
    %54 = vector.extract_strided_slice %53 {offsets = [0, 8], sizes = [4, 64], strides = [1, 1]} : vector<4x72xf32> to vector<4x64xf32>
    %c52 = arith.constant 52 : index
    %c0_63 = arith.constant 0 : index
    %55 = vector.load %arg5[%c52, %c0_63] : memref<64x64xf32, #tpu.memory_space<vmem>>, vector<4x64xf32>
    tpu.vector_store %arg5[%c52, %c0_63], %54 {strides = array<i32>} : memref<64x64xf32, #tpu.memory_space<vmem>>, vector<4x64xf32>,
    %c0_64 = arith.constant 0 : index
    %c5_65 = arith.constant 5 : index
    %c0_66 = arith.constant 0 : index
    %c0_67 = arith.constant 0 : index
    %56 = vector.load %arg1[%c0_64, %c5_65, %c0_66, %c0_67] : memref<1x8x4x72xf32, #tpu.memory_space<vmem>>, vector<1x1x4x72xf32>
    %57 = vector.shape_cast %56 : vector<1x1x4x72xf32> to vector<4x72xf32>
    %58 = vector.extract_strided_slice %57 {offsets = [0, 8], sizes = [4, 64], strides = [1, 1]} : vector<4x72xf32> to vector<4x64xf32>
    %c56 = arith.constant 56 : index
    %c0_68 = arith.constant 0 : index
    %59 = vector.load %arg5[%c56, %c0_68] : memref<64x64xf32, #tpu.memory_space<vmem>>, vector<4x64xf32>
    tpu.vector_store %arg5[%c56, %c0_68], %58 {strides = array<i32>} : memref<64x64xf32, #tpu.memory_space<vmem>>, vector<4x64xf32>,
    %c0_69 = arith.constant 0 : index
    %c7_70 = arith.constant 7 : index
    %c0_71 = arith.constant 0 : index
    %c0_72 = arith.constant 0 : index
    %60 = vector.load %arg1[%c0_69, %c7_70, %c0_71, %c0_72] : memref<1x8x4x72xf32, #tpu.memory_space<vmem>>, vector<1x1x4x72xf32>
    %61 = vector.shape_cast %60 : vector<1x1x4x72xf32> to vector<4x72xf32>
    %62 = vector.extract_strided_slice %61 {offsets = [0, 8], sizes = [4, 64], strides = [1, 1]} : vector<4x72xf32> to vector<4x64xf32>
    %c60 = arith.constant 60 : index
    %c0_73 = arith.constant 0 : index
    %63 = vector.load %arg5[%c60, %c0_73] : memref<64x64xf32, #tpu.memory_space<vmem>>, vector<4x64xf32>
    tpu.vector_store %arg5[%c60, %c0_73], %62 {strides = array<i32>} : memref<64x64xf32, #tpu.memory_space<vmem>>, vector<4x64xf32>,
    %c0_74 = arith.constant 0 : index
    %c0_75 = arith.constant 0 : index
    %64 = vector.load %arg2[%c0_74, %c0_75] : memref<8x64xf32, #tpu.memory_space<vmem>>, vector<8x64xf32>
    %c0_76 = arith.constant 0 : index
    %c0_77 = arith.constant 0 : index
    %65 = vector.load %arg5[%c0_76, %c0_77] : memref<64x64xf32, #tpu.memory_space<vmem>>, vector<64x64xf32>
    %cst = arith.constant dense<0.000000e+00> : vector<8x64xf32>
    %66 = tpu.matmul %64, %65, %cst {dimension_numbers = #tpu.dot_dimension_numbers<[1], [0], [0], [1], [0, 0, 1, 1], [], []>} : vector<8x64xf32>, vector<64x64xf32>, vector<8x64xf32> -> vector<8x64xf32>
    %c0_78 = arith.constant 0 : index
    %c0_79 = arith.constant 0 : index
    %67 = vector.load %arg3[%c0_78, %c0_79] : memref<8x1xf32, #tpu.memory_space<vmem>>, vector<8x1xf32>
    %68 = vector.broadcast %67 : vector<8x1xf32> to vector<8x64xf32>
    %69 = arith.addf %66, %68 : vector<8x64xf32>
    %cst_80 = arith.constant dense<0.000000e+00> : vector<8xf32>
    %70 = vector.multi_reduction <add>, %69, %cst_80 [1] : vector<8x64xf32> to vector<8xf32>
    %71 = vector.shape_cast %70 : vector<8xf32> to vector<8x1xf32>
    %cst_81 = arith.constant 6.400000e+01 : f32
    %72 = vector.broadcast %cst_81 : f32 to vector<8x1xf32>
    %73 = arith.divf %71, %72 : vector<8x1xf32>
    %74 = vector.broadcast %73 : vector<8x1xf32> to vector<8x64xf32>
    %75 = arith.subf %69, %74 : vector<8x64xf32>
    %76 = arith.mulf %75, %75 : vector<8x64xf32>
    %cst_82 = arith.constant dense<0.000000e+00> : vector<8xf32>
    %77 = vector.multi_reduction <add>, %76, %cst_82 [1] : vector<8x64xf32> to vector<8xf32>
    %78 = vector.shape_cast %77 : vector<8xf32> to vector<8x1xf32>
    %cst_83 = arith.constant 6.400000e+01 : f32
    %79 = vector.broadcast %cst_83 : f32 to vector<8x1xf32>
    %80 = arith.divf %78, %79 : vector<8x1xf32>
    %cst_84 = arith.constant 9.99999974E-6 : f32
    %81 = vector.broadcast %cst_84 : f32 to vector<8x1xf32>
    %82 = arith.addf %80, %81 : vector<8x1xf32>
    %83 = math.rsqrt %82 : vector<8x1xf32>
    %84 = vector.broadcast %83 : vector<8x1xf32> to vector<8x64xf32>
    %85 = arith.mulf %75, %84 : vector<8x64xf32>
    %cst_85 = arith.constant 0.000000e+00 : f32
    %86 = vector.broadcast %cst_85 : f32 to vector<8x64xf32>
    %87 = arith.cmpf oge, %85, %86 : vector<8x64xf32>
    %cst_86 = arith.constant 2.000000e-01 : f32
    %88 = vector.broadcast %cst_86 : f32 to vector<8x64xf32>
    %89 = arith.mulf %88, %85 : vector<8x64xf32>
    %90 = arith.select %87, %85, %89 : vector<8x64xi1>, vector<8x64xf32>
    %c0_87 = arith.constant 0 : index
    %c0_88 = arith.constant 0 : index
    %c0_89 = arith.constant 0 : index
    %91 = vector.load %arg4[%c0_87, %c0_88, %c0_89] : memref<1x8x64xf32, #tpu.memory_space<vmem>>, vector<1x8x64xf32>
    %92 = vector.shape_cast %91 : vector<1x8x64xf32> to vector<8x64xf32>
    %93 = vector.shape_cast %90 : vector<8x64xf32> to vector<1x8x64xf32>
    tpu.vector_store %arg4[%c0_87, %c0_88, %c0_89], %93 {strides = array<i32>} : memref<1x8x64xf32, #tpu.memory_space<vmem>>, vector<1x8x64xf32>,
    return
  }
  func.func @transform_0(%arg0: i32) -> (i32, i32, i32, i32) {
    %c0_i32 = arith.constant 0 : i32
    %c0_i32_0 = arith.constant 0 : i32
    %c0_i32_1 = arith.constant 0 : i32
    %c0_i32_2 = arith.constant 0 : i32
    return %arg0, %c0_i32, %c0_i32_0, %c0_i32_1 : i32, i32, i32, i32
  }
  func.func @transform_1(%arg0: i32) -> (i32, i32) {
    %c0_i32 = arith.constant 0 : i32
    %c0_i32_0 = arith.constant 0 : i32
    %c0_i32_1 = arith.constant 0 : i32
    return %c0_i32, %c0_i32_0 : i32, i32
  }
  func.func @transform_2(%arg0: i32) -> (i32, i32) {
    %c0_i32 = arith.constant 0 : i32
    %c0_i32_0 = arith.constant 0 : i32
    %c0_i32_1 = arith.constant 0 : i32
    return %c0_i32, %c0_i32_0 : i32, i32
  }
  func.func @transform_3(%arg0: i32) -> (i32, i32, i32) {
    %c0_i32 = arith.constant 0 : i32
    %c0_i32_0 = arith.constant 0 : i32
    %c0_i32_1 = arith.constant 0 : i32
    return %arg0, %c0_i32, %c0_i32_0 : i32, i32, i32
  }
}

</mosaic_0001>

<llo_original>
// kernel: conv_instancenorm_leakyrelu.1
$region0: #{conv_instancenorm_leakyrelu.1}
  #allocation0 [shape = 'u32[]', space=smem, size = 0x4, offset = 0x4, fixed_abs, tag = 'smem constant byte address 0x4 - core index']
  #allocation1 [shape = 'u32[144,128]{1,0:T(1,128)}', space=vmem, size = 0x12000, scoped, tag = 'internal scratch']
  #allocation2 [shape = 'f32[64,64]{1,0:T(8,128)}', space=vmem, size = 0x8000, scoped, tag = 'scratch operand']
  %s0 = inlined_call_operand.vmem [shape: f32[2,8,4,72], index: 0, kind: input, shape index: {}]
  %s1 = inlined_call_operand.vmem [shape: f32[8,64], index: 1, kind: input, shape index: {}]
  %s2 = inlined_call_operand.vmem [shape: f32[8,1], index: 2, kind: input, shape index: {}]
  %s3 = inlined_call_operand.vmem [shape: f32[2,8,64], index: 3, kind: output, shape index: {}]
  %s4 = sld [smem:[#allocation0]]
  $region45: #{conv_instancenorm_leakyrelu.1} parent=0
    _
  %s6 = ssub.s32 1, %s4
  %s7 = scalar_select 0, %s6, %s4
  loop: start=0, step=1, limit=4
  $region2: #{conv_instancenorm_leakyrelu.1} parent=0 // loop_pre_header
    _
  $region3: #{conv_instancenorm_leakyrelu.1} parent=0 // loop_header
    %s9 = sphi 0, %s13
    %p10 = scmp.ge.s32.totalorder %s9, 4
    %s19 = sphi 0, %s21
    %s22 = sphi 0, %s19
    %s23 = sphi 0, %s22
    %s39 = sphi 0, %s23
    %s43 = sphi 0, %s43
    %s45 = sphi 0, %s43
    %s46 = sphi 0, %s45
    %s60 = sphi 0, %s46
    %s64 = sphi 0, %s64
    %s66 = sphi 0, %s64
    %s67 = sphi 0, %s66
    %s81 = sphi 0, %s67
    %s87 = sphi 0, %s89
    %s90 = sphi 0, %s87
    %s91 = sphi 0, %s90
    %s107 = sphi 0, %s91
  $region4: #{conv_instancenorm_leakyrelu.1} parent=0 // loop_header_branch
    %12 = sbr.rel (%p10) target = $region8
  $region5: #{conv_instancenorm_leakyrelu.1} parent=0 // loop_body
    %s14 = ssub.s32 %s9, 1
    %s15 = ssub.s32 %s9, 2
    %s16 = sadd.s32 %s9, 1
    %s17 = ssub.s32 %s9, %s16
    %p18 = scmp.eq.s32.totalorder %s17, 0
    %s20 = sadd.s32 %s19, 1
    %s21 = scalar_select %p18, %s19, %s20
    %p24 = pneg %p18
    %p25 = scmp.eq.s32.totalorder %s9, 1
    %p26 = por %p24, %p25
    %p27 = scmp.ne.s32.totalorder %s19, %s22
    %p28 = scmp.eq.s32.totalorder %s9, 0
    %p29 = por %p27, %p28
    %p30 = scmp.ne.s32.totalorder %s19, %s22
    %p31 = scmp.eq.s32.totalorder %s14, 1
    %p32 = por %p30, %p31
    %p33 = scmp.ne.s32.totalorder %s22, %s23
    %p34 = scmp.eq.s32.totalorder %s14, 0
    %p35 = por %p33, %p34
    %p36 = scmp.ne.s32.totalorder %s22, %s23
    %p37 = scmp.eq.s32.totalorder %s15, 1
    %p38 = por %p36, %p37
    %p40 = scmp.ne.s32.totalorder %s23, %s39
    %p41 = scmp.eq.s32.totalorder %s15, 0
    %p42 = por %p40, %p41
    %s44 = sadd.s32 %s43, 1
    %p47 = scmp.eq.s32.totalorder %s9, 1
    %p48 = scmp.ne.s32.totalorder %s43, %s45
    %p49 = scmp.eq.s32.totalorder %s9, 0
    %p50 = por %p48, %p49
    %p51 = scmp.ne.s32.totalorder %s43, %s45
    %p52 = scmp.eq.s32.totalorder %s14, 1
    %p53 = por %p51, %p52
    %p54 = scmp.ne.s32.totalorder %s45, %s46
    %p55 = scmp.eq.s32.totalorder %s14, 0
    %p56 = por %p54, %p55
    %p57 = scmp.ne.s32.totalorder %s45, %s46
    %p58 = scmp.eq.s32.totalorder %s15, 1
    %p59 = por %p57, %p58
    %p61 = scmp.ne.s32.totalorder %s46, %s60
    %p62 = scmp.eq.s32.totalorder %s15, 0
    %p63 = por %p61, %p62
    %s65 = sadd.s32 %s64, 1
    %p68 = scmp.eq.s32.totalorder %s9, 1
    %p69 = scmp.ne.s32.totalorder %s64, %s66
    %p70 = scmp.eq.s32.totalorder %s9, 0
    %p71 = por %p69, %p70
    %p72 = scmp.ne.s32.totalorder %s64, %s66
    %p73 = scmp.eq.s32.totalorder %s14, 1
    %p74 = por %p72, %p73
    %p75 = scmp.ne.s32.totalorder %s66, %s67
    %p76 = scmp.eq.s32.totalorder %s14, 0
    %p77 = por %p75, %p76
    %p78 = scmp.ne.s32.totalorder %s66, %s67
    %p79 = scmp.eq.s32.totalorder %s15, 1
    %p80 = por %p78, %p79
    %p82 = scmp.ne.s32.totalorder %s67, %s81
    %p83 = scmp.eq.s32.totalorder %s15, 0
    %p84 = por %p82, %p83
    %s85 = ssub.s32 %s9, %s16
    %p86 = scmp.eq.s32.totalorder %s85, 0
    %s88 = sadd.s32 %s87, 1
    %s89 = scalar_select %p86, %s87, %s88
    %p92 = pneg %p86
    %p93 = scmp.eq.s32.totalorder %s9, 1
    %p94 = por %p92, %p93
    %p95 = scmp.ne.s32.totalorder %s87, %s90
    %p96 = scmp.eq.s32.totalorder %s9, 0
    %p97 = por %p95, %p96
    %p98 = scmp.ne.s32.totalorder %s87, %s90
    %p99 = scmp.eq.s32.totalorder %s14, 1
    %p100 = por %p98, %p99
    %p101 = scmp.ne.s32.totalorder %s90, %s91
    %p102 = scmp.eq.s32.totalorder %s14, 0
    %p103 = por %p101, %p102
    %p104 = scmp.ne.s32.totalorder %s90, %s91
    %p105 = scmp.eq.s32.totalorder %s15, 1
    %p106 = por %p104, %p105
    %p108 = scmp.ne.s32.totalorder %s91, %s107
    %p109 = scmp.eq.s32.totalorder %s15, 0
    %p110 = por %p108, %p109
    %p111 = scmp.le.s32.totalorder 1, %s9
    %p112 = scmp.lt.s32.totalorder %s9, 3
    %p113 = pnand %p111, %p112
    %p114 = pneg %p113
    // Predicated region
    $region9: #{conv_instancenorm_leakyrelu.1} parent=5 // pred_check
      _
    $region10: #{conv_instancenorm_leakyrelu.1} parent=5 // pred_check_branch
      %116 = sbr.rel (%p113) target = $region12
    $region11: #{conv_instancenorm_leakyrelu.1} parent=5 // pred_region
      %s117 = ssub.s32 %s9, 1
      // Predicated region
      $region13: #{conv_instancenorm_leakyrelu.1} parent=11 // pred_check
        %p118 = pneg %p56
      $region14: #{conv_instancenorm_leakyrelu.1} parent=11 // pred_check_branch
        %120 = sbr.rel (%p118) target = $region16
      $region15: #{conv_instancenorm_leakyrelu.1} parent=11 // pred_region
        _
      $region16: #{conv_instancenorm_leakyrelu.1} parent=11 // pred_fallthru
        _
      // Predicated region
      $region17: #{conv_instancenorm_leakyrelu.1} parent=11 // pred_check
        %p121 = pneg %p77
      $region18: #{conv_instancenorm_leakyrelu.1} parent=11 // pred_check_branch
        %123 = sbr.rel (%p121) target = $region20
      $region19: #{conv_instancenorm_leakyrelu.1} parent=11 // pred_region
        _
      $region20: #{conv_instancenorm_leakyrelu.1} parent=11 // pred_fallthru
        _
    $region12: #{conv_instancenorm_leakyrelu.1} parent=5 // pred_fallthru
      _
    %p124 = scmp.lt.s32.totalorder %s9, 2
    // Predicated region
    $region21: #{conv_instancenorm_leakyrelu.1} parent=5 // pred_check
      %p125 = pneg %p124
    $region22: #{conv_instancenorm_leakyrelu.1} parent=5 // pred_check_branch
      %127 = sbr.rel (%p125) target = $region24
    $region23: #{conv_instancenorm_leakyrelu.1} parent=5 // pred_region
      // Predicated region
      $region25: #{conv_instancenorm_leakyrelu.1} parent=23 // pred_check
        %p128 = pneg %p29
      $region26: #{conv_instancenorm_leakyrelu.1} parent=23 // pred_check_branch
        %130 = sbr.rel (%p128) target = $region28
      $region27: #{conv_instancenorm_leakyrelu.1} parent=23 // pred_region
        %p131 = scmp.lt.s32.totalorder %s9, 1
        %s132 = scalar_select %p131, %s9, 1
        %s133 = smul.addr %s132, 8
        %s134 = smul.addr %s133, 4
        %s135 = scalar_lea.vmem %s0, %s134
      $region28: #{conv_instancenorm_leakyrelu.1} parent=23 // pred_fallthru
        _
    $region24: #{conv_instancenorm_leakyrelu.1} parent=5 // pred_fallthru
      _
    %p136 = scmp.le.s32.totalorder 1, %s9
    %p137 = scmp.lt.s32.totalorder %s9, 3
    %p138 = pnand %p136, %p137
    %p139 = pneg %p138
    // Predicated region
    $region29: #{conv_instancenorm_leakyrelu.1} parent=5 // pred_check
      _
    $region30: #{conv_instancenorm_leakyrelu.1} parent=5 // pred_check_branch
      %141 = sbr.rel (%p138) target = $region32
    $region31: #{conv_instancenorm_leakyrelu.1} parent=5 // pred_region
      %s142 = ssub.s32 %s9, 1
      %p143 = scmp.lt.s32.totalorder %s14, 1
      %s144 = scalar_select %p143, %s14, 1
      %s145 = smul.addr %s144, 8
      %s146 = smul.addr %s145, 4
      %s147 = scalar_lea.vmem %s0, %s146
      %p148 = pneg %p35
      %p149 = pneg %p32
      %p150 = pneg %p56
      %p151 = pneg %p53
      %p152 = pneg %p77
      %p153 = pneg %p74
      %p154 = pneg %p103
      %p155 = pneg %p100
      %p156 = scmp.lt.s32.totalorder %s14, 1
      %s157 = scalar_select %p156, %s14, 1
      %s158 = smul.addr %s157, 8
      %s159 = scalar_lea.vmem %s3, %s158
      %p160 = scmp.lt.s32.totalorder %s14, 1
      %s161 = scalar_select %p160, %s14, 1
      %s162 = smul.addr %s161, 8
      %s163 = smul.addr %s162, 4
      %s164 = scalar_lea.vmem %s0, %s163
      %p165 = scmp.lt.s32.totalorder %s14, 1
      %s166 = scalar_select %p165, %s14, 1
      %s167 = smul.addr %s166, 8
      %s168 = scalar_lea.vmem %s3, %s167
      %v169 = vld [vmem:[%s164] sm:$0xf]
      %vm170 = vcmask 519168
      %171 = vst.msk [vmem:[#allocation2] sm:$0xf] %vm170, %v169
      %s172 = scalar_lea.vmem %s164, 8
      %v173 = vld [vmem:[%s172] sm:$0xf]
      %174 = vst.msk [vmem:[#allocation2 + $0x4] sm:$0xf] %vm170, %v173
      %s175 = scalar_lea.vmem %s164, 16
      %v176 = vld [vmem:[%s175] sm:$0xf]
      %177 = vst.msk [vmem:[#allocation2 + $0x8] sm:$0xf] %vm170, %v176
      %s178 = scalar_lea.vmem %s164, 24
      %v179 = vld [vmem:[%s178] sm:$0xf]
      %180 = vst.msk [vmem:[#allocation2 + $0xc] sm:$0xf] %vm170, %v179
      %s181 = scalar_lea.vmem %s164, 4
      %v182 = vld [vmem:[%s181] sm:$0xf]
      %183 = vst.msk [vmem:[#allocation2 + $0x10] sm:$0xf] %vm170, %v182
      %s184 = scalar_lea.vmem %s164, 12
      %v185 = vld [vmem:[%s184] sm:$0xf]
      %186 = vst.msk [vmem:[#allocation2 + $0x14] sm:$0xf] %vm170, %v185
      %s187 = scalar_lea.vmem %s164, 20
      %v188 = vld [vmem:[%s187] sm:$0xf]
      %189 = vst.msk [vmem:[#allocation2 + $0x18] sm:$0xf] %vm170, %v188
      %s190 = scalar_lea.vmem %s164, 28
      %v191 = vld [vmem:[%s190] sm:$0xf]
      %192 = vst.msk [vmem:[#allocation2 + $0x1c] sm:$0xf] %vm170, %v191
      %v193 = vld [vmem:[%s164] sm:$0xf]
      %195 = vrot.lane.b32.xlu0 %v193, 120
      %v196 = vpop.permute.xlu0 %195
      %198 = vst.msk [vmem:[#allocation2 + $0x20] sm:$0xf] %vm170, %v196
      %v199 = vld [vmem:[%s172] sm:$0xf]
      %201 = vrot.lane.b32.xlu0 %v199, 120
      %v202 = vpop.permute.xlu0 %201
      %204 = vst.msk [vmem:[#allocation2 + $0x24] sm:$0xf] %vm170, %v202
      %v205 = vld [vmem:[%s175] sm:$0xf]
      %207 = vrot.lane.b32.xlu0 %v205, 120
      %v208 = vpop.permute.xlu0 %207
      %210 = vst.msk [vmem:[#allocation2 + $0x28] sm:$0xf] %vm170, %v208
      %v211 = vld [vmem:[%s178] sm:$0xf]
      %213 = vrot.lane.b32.xlu0 %v211, 120
      %v214 = vpop.permute.xlu0 %213
      %216 = vst.msk [vmem:[#allocation2 + $0x2c] sm:$0xf] %vm170, %v214
      %v217 = vld [vmem:[%s181] sm:$0xf]
      %219 = vrot.lane.b32.xlu0 %v217, 120
      %v220 = vpop.permute.xlu0 %219
      %222 = vst.msk [vmem:[#allocation2 + $0x30] sm:$0xf] %vm170, %v220
      %v223 = vld [vmem:[%s184] sm:$0xf]
      %225 = vrot.lane.b32.xlu0 %v223, 120
      %v226 = vpop.permute.xlu0 %225
      %228 = vst.msk [vmem:[#allocation2 + $0x34] sm:$0xf] %vm170, %v226
      %v229 = vld [vmem:[%s187] sm:$0xf]
      %231 = vrot.lane.b32.xlu0 %v229, 120
      %v232 = vpop.permute.xlu0 %231
      %234 = vst.msk [vmem:[#allocation2 + $0x38] sm:$0xf] %vm170, %v232
      %v235 = vld [vmem:[%s190] sm:$0xf]
      %237 = vrot.lane.b32.xlu0 %v235, 120
      %v238 = vpop.permute.xlu0 %237
      %240 = vst.msk [vmem:[#allocation2 + $0x3c] sm:$0xf] %vm170, %v238
      %v241 = vld [vmem:[%s1] sm:$0xff]
      %v242 = vld [vmem:[#allocation2] sm:$0xff]
      %v243 = vld [vmem:[#allocation2 + $0x8] sm:$0xff]
      %v244 = vld [vmem:[#allocation2 + $0x10] sm:$0xff]
      %v245 = vld [vmem:[#allocation2 + $0x18] sm:$0xff]
      %v246 = vld [vmem:[#allocation2 + $0x20] sm:$0xff]
      %v247 = vld [vmem:[#allocation2 + $0x28] sm:$0xff]
      %v248 = vld [vmem:[#allocation2 + $0x30] sm:$0xff]
      %v249 = vld [vmem:[#allocation2 + $0x38] sm:$0xff]
      %v250 = vld [vmem:[%s2] sm:$0xff]
      %252 = vset.pattern.permute.xlu0 0
      %253 = vperm.xlu0 %252, %v250
      %v254 = vpop.permute.xlu0 %253
      %vm256 = vcmask 523264
      %v258 = vsel %vm256, %v241, 0
      %260 = vmatprep.subr.mxu0 0.0
      %261 = vmatpush1.msra.mxu0 %v242
      %262 = vmatprep.subr.mxu0 0.0
      %263 = vmatpush1.msra.mxu0 %v243
      %264 = vmatprep.subr.mxu0 0.0
      %265 = vmatpush1.msra.mxu0 %v244
      %266 = vmatprep.subr.mxu0 0.0
      %267 = vmatpush1.msra.mxu0 %v245
      %268 = vmatprep.subr.mxu0 0.0
      %269 = vmatpush1.msra.mxu0 %v246
      %270 = vmatprep.subr.mxu0 0.0
      %271 = vmatpush1.msra.mxu0 %v247
      %272 = vmatprep.subr.mxu0 0.0
      %273 = vmatpush1.msra.mxu0 %v248
      %274 = vmatprep.subr.mxu0 0.0
      %275 = vmatpush1.msra.mxu0 %v249
      %276 = vmatprep.subr.mxu0 0.0
      %277 = vmatpush1.msra.mxu0 0.0
      %278 = vmatprep.subr.mxu0 0.0
      %279 = vmatpush1.msra.mxu0 0.0
      %280 = vmatprep.subr.mxu0 0.0
      %281 = vmatpush1.msra.mxu0 0.0
      %282 = vmatprep.subr.mxu0 0.0
      %283 = vmatpush1.msra.mxu0 0.0
      %284 = vmatprep.subr.mxu0 0.0
      %285 = vmatpush1.msra.mxu0 0.0
      %286 = vmatprep.subr.mxu0 0.0
      %287 = vmatpush1.msra.mxu0 0.0
      %288 = vmatprep.subr.mxu0 0.0
      %289 = vmatpush1.msra.mxu0 0.0
      %290 = vmatprep.subr.mxu0 0.0
      %291 = vmatpush1.msra.mxu0 0.0
      %292 = vmatprep.subr.mxu0 0.0
      %293 = vmatpush1.msra.mxu0 0.0
      %294 = vmatprep.subr.mxu0 0.0
      %295 = vmatpush1.msra.mxu0 0.0
      %296 = vmatprep.subr.mxu0 0.0
      %297 = vmatpush1.msra.mxu0 0.0
      %298 = vmatprep.subr.mxu0 0.0
      %299 = vmatpush1.msra.mxu0 0.0
      %300 = vmatprep.subr.mxu0 0.0
      %301 = vmatpush1.msra.mxu0 0.0
      %302 = vmatprep.subr.mxu0 0.0
      %303 = vmatpush1.msra.mxu0 0.0
      %304 = vmatprep.subr.mxu0 0.0
      %305 = vmatpush1.msra.mxu0 0.0
      %306 = vmatprep.subr.mxu0 0.0
      %307 = vmatpush1.msra.mxu0 0.0
      %308 = vmatprep.subr.mxu0 0.0
      %309 = vmatpush1.msra.mxu0 0.0
      %310 = vmatprep.subr.mxu0 0.0
      %311 = vmatpush1.msra.mxu0 0.0
      %312 = vmatprep.subr.mxu0 0.0
      %313 = vmatpush1.msra.mxu0 0.0
      %314 = vmatprep.subr.mxu0 0.0
      %315 = vmatpush1.msra.mxu0 0.0
      %316 = vmatprep.subr.mxu0 0.0
      %317 = vmatpush1.msra.mxu0 0.0
      %318 = vmatprep.subr.mxu0 0.0
      %319 = vmatpush1.msra.mxu0 0.0
      %320 = vmatprep.subr.mxu0 0.0
      %321 = vmatpush1.msra.mxu0 0.0
      %322 = vmatprep.subr.mxu0 0.0
      %323 = vmatpush1.msra.mxu0 0.0
      %324 = vmatprep.mubr.f32.mxu0 0.0
      %325 = vmatmul.mubr.f32.gmra.mrb[0].mxu0 %v258
      %v326 = vpop.f32.mrb[0].mxu0
      %v327 = vadd.f32 %v254, %v326
      %v328 = vpop.f32.mrb[0].mxu0
      %329 = vdwg.mxu0
      %v330 = vsel %vm256, %v327, 0.0
      %331 = vadd.xlane.f32.xlu0 %v330
      %v332 = vpop.xlane.xlu0 %331
      %v333 = vrcp.pop 64.0
      %v334 = vmul.f32 %v332, %v333
      %v335 = vsub.f32 %v327, %v334
      %v336 = vmul.f32 %v335, %v335
      %v337 = vsel %vm256, %v336, 0.0
      %338 = vadd.xlane.f32.xlu0 %v337
      %v339 = vpop.xlane.xlu0 %338
      %v340 = vmul.f32 %v339, %v333
      %v341 = vadd.f32 %v340, 1e-05
      %v342 = vrsqrt.pop %v341
      %v343 = vmul.f32 %v335, %v342
      %vm344 = vcmp.ge.f32.partialorder %v343, 0.0
      %v345 = vmul.f32 %v343, 0.2
      %v346 = vsel %vm344, %v343, %v345
      %347 = vst.msk [vmem:[%s168] sm:$0xff] %vm256, %v346
      %p348 = scmp.lt.s32.totalorder %s14, 1
      %s349 = scalar_select %p348, %s14, 1
      %s350 = smul.addr %s349, 8
      %s351 = scalar_lea.vmem %s3, %s350
      // Predicated region
      $region33: #{conv_instancenorm_leakyrelu.1} parent=31 // pred_check
        %p352 = pneg %p100
      $region34: #{conv_instancenorm_leakyrelu.1} parent=31 // pred_check_branch
        %354 = sbr.rel (%p352) target = $region36
      $region35: #{conv_instancenorm_leakyrelu.1} parent=31 // pred_region
        _
      $region36: #{conv_instancenorm_leakyrelu.1} parent=31 // pred_fallthru
        _
    $region32: #{conv_instancenorm_leakyrelu.1} parent=5 // pred_fallthru
      _
    %p355 = scmp.le.s32.totalorder 2, %s9
    // Predicated region
    $region37: #{conv_instancenorm_leakyrelu.1} parent=5 // pred_check
      %p356 = pneg %p355
    $region38: #{conv_instancenorm_leakyrelu.1} parent=5 // pred_check_branch
      %358 = sbr.rel (%p356) target = $region40
    $region39: #{conv_instancenorm_leakyrelu.1} parent=5 // pred_region
      %s359 = ssub.s32 %s9, 2
      // Predicated region
      $region41: #{conv_instancenorm_leakyrelu.1} parent=39 // pred_check
        %p360 = pneg %p106
      $region42: #{conv_instancenorm_leakyrelu.1} parent=39 // pred_check_branch
        %362 = sbr.rel (%p360) target = $region44
      $region43: #{conv_instancenorm_leakyrelu.1} parent=39 // pred_region
        %p363 = scmp.lt.s32.totalorder %s15, 1
        %s364 = scalar_select %p363, %s15, 1
        %s365 = smul.addr %s364, 8
        %s366 = scalar_lea.vmem %s3, %s365
      $region44: #{conv_instancenorm_leakyrelu.1} parent=39 // pred_fallthru
        _
    $region40: #{conv_instancenorm_leakyrelu.1} parent=5 // pred_fallthru
      _
  $region6: #{conv_instancenorm_leakyrelu.1} parent=0 // loop_footer
    %s13 = sadd.s32 1, %s9
  $region7: #{conv_instancenorm_leakyrelu.1} parent=0 // loop_footer_branch
    %8 = sbr.rel target = $region3
  $region8: #{conv_instancenorm_leakyrelu.1} parent=0 // loop_exit
    _

</llo_original>
